<compile_context>
chip_gen: v7x
topology: tpu7x:2x2x1
jax: 0.10.0
libtpu: 0.0.40
codegen_flags: <defaults>
</compile_context>

<pallas_src>
import functools

import jax
import jax.numpy as jnp
from jax import lax
from jax.experimental import pallas as pl
from jax.experimental.pallas import tpu as pltpu


# 3x3 tap offsets in (kh, kw) raster order -> tap index t = (dh+1)*3 + (dw+1)
_TAPS = [(-1, -1), (-1, 0), (-1, 1),
         (0, -1),  (0, 0),  (0, 1),
         (1, -1),  (1, 0),  (1, 1)]


def _residual_block_kernel(H, W, x_ref, w_ref, sb_ref, mask_ref, out_ref):
    """One block of images per grid step.

    x_ref    : (R, H*W)     R = imgs_per_block * C; row i*C + c = image i, channel c
    w_ref    : (2, R, 9*R)  block-diagonal packed 3x3 weights for conv1 / conv2
    sb_ref   : (R, 4)       folded BatchNorm columns [scale1, bias1, scale2, bias2]
    mask_ref : (8, H*W)     f32 'SAME'-padding boundary masks (8 non-center taps)
    out_ref  : (R, H*W)
    """
    R, L = x_ref.shape  # L == H * W

    def conv3x3(inp, w):
        # inp: (R, L) f32 -> (R, L) f32.
        # Build the im2col-style (9R, L) operand: every chunk of R rows is one
        # lane-rotated (XLU), boundary-masked (VPU) copy of the slab; then one
        # MXU matmul performs the whole 9*R-term channel/tap reduction.
        rows = []
        mi = 0
        for dh, dw in _TAPS:
            off = dh * W + dw
            if off == 0:
                rows.append(inp)                       # centre tap: no shift, no mask
            else:
                shifted = pltpu.roll(inp, (-off) % L, 1)
                rows.append(shifted * mask_ref[mi:mi + 1, :])
                mi += 1
        taps = jnp.concatenate(rows, axis=0)           # (9R, L), 8-aligned sublane chunks
        return jnp.dot(w, taps, preferred_element_type=jnp.float32)

    x = x_ref[...].astype(jnp.float32)

    h = conv3x3(x, w_ref[0]) * sb_ref[:, 0:1] + sb_ref[:, 1:2]   # conv1 + BN1
    h = jnp.maximum(h, 0.0)                                      # ReLU
    y = conv3x3(h, w_ref[1]) * sb_ref[:, 2:3] + sb_ref[:, 3:4]   # conv2 + BN2

    out_ref[...] = (x + y).astype(out_ref.dtype)                 # identity skip


def _pack_blockdiag(w_taps, ipb):
    """w_taps: (9, C_in, C_out).  Returns (ipb*C, 9*ipb*C) where row (i*C + co),
    column (t*ipb*C + i*C + ci) holds w_taps[t, ci, co]  (block-diagonal per tap,
    so channel mixing never crosses the images stacked along sublanes)."""
    eye = jnp.eye(ipb, dtype=w_taps.dtype)
    blocks = [jnp.kron(eye, w_taps[t].T) for t in range(9)]
    return jnp.concatenate(blocks, axis=1)


def _boundary_masks(H, W):
    """(8, H*W) f32 masks: 1 where the tap source (h+dh, w+dw) is inside the image."""
    pos = jnp.arange(H * W)
    hpos = pos // W
    wpos = pos % W
    rows = []
    for dh, dw in _TAPS:
        if dh == 0 and dw == 0:
            continue
        m = ((hpos + dh >= 0) & (hpos + dh < H) &
             (wpos + dw >= 0) & (wpos + dw < W))
        rows.append(m.astype(jnp.float32))
    return jnp.stack(rows, axis=0)


def residual_block(x, w_taps1, s1, b1, w_taps2, s2, b2, *, imgs_per_block=None):
    """x: (N, C, H, W) f32.  w_taps*: (9, C_in, C_out) 3x3 taps in raster order.
    s*/b*: (C,) folded BatchNorm scale / bias.  Returns (N, C, H, W).
    imgs_per_block: images folded into one grid step (default: all of them;
    on v7x use N // 2 so both TensorCores get a block)."""
    N, C, H, W = x.shape
    HW = H * W
    if imgs_per_block is None:
        imgs_per_block = N
    assert N % imgs_per_block == 0
    R = imgs_per_block * C
    n_blocks = N // imgs_per_block

    # Free row-major relabel: row (n*C + c) = image n, channel c.
    xf = x.reshape(N * C, HW)

    # Pack both convs' weights into one resident (2, R, 9R) array.
    w_all = jnp.stack([_pack_blockdiag(w_taps1, imgs_per_block),
                       _pack_blockdiag(w_taps2, imgs_per_block)], axis=0)

    # Folded BN params, tiled per image in the block: (R, 4).
    sb_all = jnp.stack([jnp.tile(s1, imgs_per_block),
                        jnp.tile(b1, imgs_per_block),
                        jnp.tile(s2, imgs_per_block),
                        jnp.tile(b2, imgs_per_block)], axis=1)

    masks = _boundary_masks(H, W)                    # (8, HW), resident

    kernel = functools.partial(_residual_block_kernel, H, W)
    resident2 = lambda n: (0, 0)
    resident3 = lambda n: (0, 0, 0)

    out = pl.pallas_call(
        kernel,
        out_shape=jax.ShapeDtypeStruct((N * C, HW), x.dtype),
        grid=(n_blocks,),
        in_specs=[
            pl.BlockSpec((R, HW), lambda n: (n, 0)),          # activations
            pl.BlockSpec((2, R, 9 * R), resident3),           # packed weights (resident)
            pl.BlockSpec((R, 4), resident2),                  # folded BN scale/bias
            pl.BlockSpec((8, HW), resident2),                 # boundary masks
        ],
        out_specs=pl.BlockSpec((R, HW), lambda n: (n, 0)),
        compiler_params=pltpu.CompilerParams(
            dimension_semantics=("parallel",)),
    )(xf, w_all, sb_all, masks)
    return out.reshape(N, C, H, W)


def _reference(x, w_taps1, s1, b1, w_taps2, s2, b2):
    """Pure-JAX reference (NCHW conv via lax.conv_general_dilated, full precision)."""
    C = x.shape[1]
    dn = ("NCHW", "HWIO", "NCHW")

    def conv(v, w_taps):
        return lax.conv_general_dilated(v, w_taps.reshape(3, 3, C, C),
                                        (1, 1), "SAME", dimension_numbers=dn,
                                        precision=lax.Precision.HIGHEST)

    s1b, b1b = s1.reshape(1, C, 1, 1), b1.reshape(1, C, 1, 1)
    s2b, b2b = s2.reshape(1, C, 1, 1), b2.reshape(1, C, 1, 1)
    h = jnp.maximum(conv(x, w_taps1) * s1b + b1b, 0.0)
    return x + conv(h, w_taps2) * s2b + b2b


if __name__ == "__main__":
    N, C, H, W = 2, 4, 16, 16
    eps = 1e-5

    key = jax.random.PRNGKey(0)
    kx, kw1, kw2, kg1, kb1, kg2, kb2, km1, kv1, km2, kv2 = jax.random.split(key, 11)

    # NCHW input, matching the PyTorch module's layout.
    x = jax.random.normal(kx, (N, C, H, W), jnp.float32)

    # Conv weights as (kh*3+kw, C_in, C_out) taps.
    w1 = jax.random.normal(kw1, (9, C, C), jnp.float32) * 0.2
    w2 = jax.random.normal(kw2, (9, C, C), jnp.float32) * 0.2

    # BatchNorm params (inference mode: fold running stats into scale/bias).
    def fold_bn(kg, kb, km, kv):
        gamma = 1.0 + 0.1 * jax.random.normal(kg, (C,), jnp.float32)
        beta = 0.1 * jax.random.normal(kb, (C,), jnp.float32)
        mean = 0.1 * jax.random.normal(km, (C,), jnp.float32)
        var = jnp.abs(jax.random.normal(kv, (C,), jnp.float32)) + 0.5
        scale = gamma / jnp.sqrt(var + eps)
        bias = beta - mean * scale
        return scale, bias

    s1, b1 = fold_bn(kg1, kb1, km1, kv1)
    s2, b2 = fold_bn(kg2, kb2, km2, kv2)

    out = residual_block(x, w1, s1, b1, w2, s2, b2)
    out = jax.block_until_ready(out)

    ref = _reference(x, w1, s1, b1, w2, s2, b2)
    assert out.shape == (N, C, H, W)
    # Reference is computed at HIGHEST precision; the in-kernel MXU f32 matmul
    # may use reduced-precision passes depending on generation/default, so the
    # tolerance is loosened vs the old pure-VPU version (per review guidance).
    assert jnp.allclose(out, ref, rtol=1e-2, atol=1e-2), "mismatch vs reference"

    # TODO(synk): BatchNorm2d is implemented in inference mode (folded running
    # stats); PyTorch training-mode batch statistics are not computed here.
    print("KERNEL_OK")
</pallas_src>

<mosaic_0001>
module attributes {stable_mosaic.version = 11 : i64} {
  func.func @_residual_block_kernel(%arg0: i32, %arg1: memref<8x256xf32, #tpu.memory_space<vmem>>, %arg2: memref<2x8x72xf32, #tpu.memory_space<vmem>>, %arg3: memref<8x4xf32, #tpu.memory_space<vmem>>, %arg4: memref<8x256xf32, #tpu.memory_space<vmem>>, %arg5: memref<8x256xf32, #tpu.memory_space<vmem>>) attributes {dimension_semantics = [#tpu.dimension_semantics<parallel>], iteration_bounds = array<i64: 1>, scalar_prefetch = 0 : i64, scratch_operands = 0 : i64, tpu.core_type = #tpu.core_type<tc>, window_params = [{transform_indices = @transform_0, window_bounds = array<i64: 8, 256>}, {pipeline_mode = #tpu.pipeline_mode<synchronous>, transform_indices = @transform_1, window_bounds = array<i64: 2, 8, 72>}, {pipeline_mode = #tpu.pipeline_mode<synchronous>, transform_indices = @transform_2, window_bounds = array<i64: 8, 4>}, {pipeline_mode = #tpu.pipeline_mode<synchronous>, transform_indices = @transform_3, window_bounds = array<i64: 8, 256>}, {transform_indices = @transform_4, window_bounds = array<i64: 8, 256>}]} {
    %c0 = arith.constant 0 : index
    %c0_0 = arith.constant 0 : index
    %0 = vector.load %arg1[%c0, %c0_0] : memref<8x256xf32, #tpu.memory_space<vmem>>, vector<8x256xf32>
    %c0_1 = arith.constant 0 : index
    %c0_2 = arith.constant 0 : index
    %c0_3 = arith.constant 0 : index
    %1 = vector.load %arg2[%c0_1, %c0_2, %c0_3] : memref<2x8x72xf32, #tpu.memory_space<vmem>>, vector<1x8x72xf32>
    %2 = vector.shape_cast %1 : vector<1x8x72xf32> to vector<8x72xf32>
    %c17_i32 = arith.constant 17 : i32
    %3 = tpu.dynamic_rotate %0 by %c17_i32 dim 1 : vector<8x256xf32>, i32 -> vector<8x256xf32>
    %c0_4 = arith.constant 0 : index
    %c0_5 = arith.constant 0 : index
    %4 = vector.load %arg4[%c0_4, %c0_5] : memref<8x256xf32, #tpu.memory_space<vmem>>, vector<1x256xf32>
    %5 = vector.broadcast %4 : vector<1x256xf32> to vector<8x256xf32>
    %6 = arith.mulf %3, %5 : vector<8x256xf32>
    %c16_i32 = arith.constant 16 : i32
    %7 = tpu.dynamic_rotate %0 by %c16_i32 dim 1 : vector<8x256xf32>, i32 -> vector<8x256xf32>
    %c1 = arith.constant 1 : index
    %c0_6 = arith.constant 0 : index
    %8 = vector.load %arg4[%c1, %c0_6] : memref<8x256xf32, #tpu.memory_space<vmem>>, vector<1x256xf32>
    %9 = vector.broadcast %8 : vector<1x256xf32> to vector<8x256xf32>
    %10 = arith.mulf %7, %9 : vector<8x256xf32>
    %c15_i32 = arith.constant 15 : i32
    %11 = tpu.dynamic_rotate %0 by %c15_i32 dim 1 : vector<8x256xf32>, i32 -> vector<8x256xf32>
    %c2 = arith.constant 2 : index
    %c0_7 = arith.constant 0 : index
    %12 = vector.load %arg4[%c2, %c0_7] : memref<8x256xf32, #tpu.memory_space<vmem>>, vector<1x256xf32>
    %13 = vector.broadcast %12 : vector<1x256xf32> to vector<8x256xf32>
    %14 = arith.mulf %11, %13 : vector<8x256xf32>
    %c1_i32 = arith.constant 1 : i32
    %15 = tpu.dynamic_rotate %0 by %c1_i32 dim 1 : vector<8x256xf32>, i32 -> vector<8x256xf32>
    %c3 = arith.constant 3 : index
    %c0_8 = arith.constant 0 : index
    %16 = vector.load %arg4[%c3, %c0_8] : memref<8x256xf32, #tpu.memory_space<vmem>>, vector<1x256xf32>
    %17 = vector.broadcast %16 : vector<1x256xf32> to vector<8x256xf32>
    %18 = arith.mulf %15, %17 : vector<8x256xf32>
    %c255_i32 = arith.constant 255 : i32
    %19 = tpu.dynamic_rotate %0 by %c255_i32 dim 1 : vector<8x256xf32>, i32 -> vector<8x256xf32>
    %c4 = arith.constant 4 : index
    %c0_9 = arith.constant 0 : index
    %20 = vector.load %arg4[%c4, %c0_9] : memref<8x256xf32, #tpu.memory_space<vmem>>, vector<1x256xf32>
    %21 = vector.broadcast %20 : vector<1x256xf32> to vector<8x256xf32>
    %22 = arith.mulf %19, %21 : vector<8x256xf32>
    %c241_i32 = arith.constant 241 : i32
    %23 = tpu.dynamic_rotate %0 by %c241_i32 dim 1 : vector<8x256xf32>, i32 -> vector<8x256xf32>
    %c5 = arith.constant 5 : index
    %c0_10 = arith.constant 0 : index
    %24 = vector.load %arg4[%c5, %c0_10] : memref<8x256xf32, #tpu.memory_space<vmem>>, vector<1x256xf32>
    %25 = vector.broadcast %24 : vector<1x256xf32> to vector<8x256xf32>
    %26 = arith.mulf %23, %25 : vector<8x256xf32>
    %c240_i32 = arith.constant 240 : i32
    %27 = tpu.dynamic_rotate %0 by %c240_i32 dim 1 : vector<8x256xf32>, i32 -> vector<8x256xf32>
    %c6 = arith.constant 6 : index
    %c0_11 = arith.constant 0 : index
    %28 = vector.load %arg4[%c6, %c0_11] : memref<8x256xf32, #tpu.memory_space<vmem>>, vector<1x256xf32>
    %29 = vector.broadcast %28 : vector<1x256xf32> to vector<8x256xf32>
    %30 = arith.mulf %27, %29 : vector<8x256xf32>
    %c239_i32 = arith.constant 239 : i32
    %31 = tpu.dynamic_rotate %0 by %c239_i32 dim 1 : vector<8x256xf32>, i32 -> vector<8x256xf32>
    %c7 = arith.constant 7 : index
    %c0_12 = arith.constant 0 : index
    %32 = vector.load %arg4[%c7, %c0_12] : memref<8x256xf32, #tpu.memory_space<vmem>>, vector<1x256xf32>
    %33 = vector.broadcast %32 : vector<1x256xf32> to vector<8x256xf32>
    %34 = arith.mulf %31, %33 : vector<8x256xf32>
    %35 = tpu.concatenate %6, %10, %14, %18, %0, %22, %26, %30, %34 in 0 : vector<8x256xf32>, vector<8x256xf32>, vector<8x256xf32>, vector<8x256xf32>, vector<8x256xf32>, vector<8x256xf32>, vector<8x256xf32>, vector<8x256xf32>, vector<8x256xf32> -> vector<72x256xf32>
    %cst = arith.constant dense<0.000000e+00> : vector<8x256xf32>
    %36 = tpu.matmul %2, %35, %cst {dimension_numbers = #tpu.dot_dimension_numbers<[1], [0], [0], [1], [0, 0, 1, 1], [], []>} : vector<8x72xf32>, vector<72x256xf32>, vector<8x256xf32> -> vector<8x256xf32>
    %c0_13 = arith.constant 0 : index
    %c0_14 = arith.constant 0 : index
    %37 = vector.load %arg3[%c0_13, %c0_14] : memref<8x4xf32, #tpu.memory_space<vmem>>, vector<8x1xf32>
    %38 = vector.broadcast %37 : vector<8x1xf32> to vector<8x256xf32>
    %39 = arith.mulf %36, %38 : vector<8x256xf32>
    %c0_15 = arith.constant 0 : index
    %c1_16 = arith.constant 1 : index
    %40 = vector.load %arg3[%c0_15, %c1_16] : memref<8x4xf32, #tpu.memory_space<vmem>>, vector<8x1xf32>
    %41 = vector.broadcast %40 : vector<8x1xf32> to vector<8x256xf32>
    %42 = arith.addf %39, %41 : vector<8x256xf32>
    %cst_17 = arith.constant 0.000000e+00 : f32
    %43 = vector.broadcast %cst_17 : f32 to vector<8x256xf32>
    %44 = arith.maximumf %42, %43 : vector<8x256xf32>
    %c1_18 = arith.constant 1 : index
    %c0_19 = arith.constant 0 : index
    %c0_20 = arith.constant 0 : index
    %45 = vector.load %arg2[%c1_18, %c0_19, %c0_20] : memref<2x8x72xf32, #tpu.memory_space<vmem>>, vector<1x8x72xf32>
    %46 = vector.shape_cast %45 : vector<1x8x72xf32> to vector<8x72xf32>
    %c17_i32_21 = arith.constant 17 : i32
    %47 = tpu.dynamic_rotate %44 by %c17_i32_21 dim 1 : vector<8x256xf32>, i32 -> vector<8x256xf32>
    %c0_22 = arith.constant 0 : index
    %c0_23 = arith.constant 0 : index
    %48 = vector.load %arg4[%c0_22, %c0_23] : memref<8x256xf32, #tpu.memory_space<vmem>>, vector<1x256xf32>
    %49 = vector.broadcast %48 : vector<1x256xf32> to vector<8x256xf32>
    %50 = arith.mulf %47, %49 : vector<8x256xf32>
    %c16_i32_24 = arith.constant 16 : i32
    %51 = tpu.dynamic_rotate %44 by %c16_i32_24 dim 1 : vector<8x256xf32>, i32 -> vector<8x256xf32>
    %c1_25 = arith.constant 1 : index
    %c0_26 = arith.constant 0 : index
    %52 = vector.load %arg4[%c1_25, %c0_26] : memref<8x256xf32, #tpu.memory_space<vmem>>, vector<1x256xf32>
    %53 = vector.broadcast %52 : vector<1x256xf32> to vector<8x256xf32>
    %54 = arith.mulf %51, %53 : vector<8x256xf32>
    %c15_i32_27 = arith.constant 15 : i32
    %55 = tpu.dynamic_rotate %44 by %c15_i32_27 dim 1 : vector<8x256xf32>, i32 -> vector<8x256xf32>
    %c2_28 = arith.constant 2 : index
    %c0_29 = arith.constant 0 : index
    %56 = vector.load %arg4[%c2_28, %c0_29] : memref<8x256xf32, #tpu.memory_space<vmem>>, vector<1x256xf32>
    %57 = vector.broadcast %56 : vector<1x256xf32> to vector<8x256xf32>
    %58 = arith.mulf %55, %57 : vector<8x256xf32>
    %c1_i32_30 = arith.constant 1 : i32
    %59 = tpu.dynamic_rotate %44 by %c1_i32_30 dim 1 : vector<8x256xf32>, i32 -> vector<8x256xf32>
    %c3_31 = arith.constant 3 : index
    %c0_32 = arith.constant 0 : index
    %60 = vector.load %arg4[%c3_31, %c0_32] : memref<8x256xf32, #tpu.memory_space<vmem>>, vector<1x256xf32>
    %61 = vector.broadcast %60 : vector<1x256xf32> to vector<8x256xf32>
    %62 = arith.mulf %59, %61 : vector<8x256xf32>
    %c255_i32_33 = arith.constant 255 : i32
    %63 = tpu.dynamic_rotate %44 by %c255_i32_33 dim 1 : vector<8x256xf32>, i32 -> vector<8x256xf32>
    %c4_34 = arith.constant 4 : index
    %c0_35 = arith.constant 0 : index
    %64 = vector.load %arg4[%c4_34, %c0_35] : memref<8x256xf32, #tpu.memory_space<vmem>>, vector<1x256xf32>
    %65 = vector.broadcast %64 : vector<1x256xf32> to vector<8x256xf32>
    %66 = arith.mulf %63, %65 : vector<8x256xf32>
    %c241_i32_36 = arith.constant 241 : i32
    %67 = tpu.dynamic_rotate %44 by %c241_i32_36 dim 1 : vector<8x256xf32>, i32 -> vector<8x256xf32>
    %c5_37 = arith.constant 5 : index
    %c0_38 = arith.constant 0 : index
    %68 = vector.load %arg4[%c5_37, %c0_38] : memref<8x256xf32, #tpu.memory_space<vmem>>, vector<1x256xf32>
    %69 = vector.broadcast %68 : vector<1x256xf32> to vector<8x256xf32>
    %70 = arith.mulf %67, %69 : vector<8x256xf32>
    %c240_i32_39 = arith.constant 240 : i32
    %71 = tpu.dynamic_rotate %44 by %c240_i32_39 dim 1 : vector<8x256xf32>, i32 -> vector<8x256xf32>
    %c6_40 = arith.constant 6 : index
    %c0_41 = arith.constant 0 : index
    %72 = vector.load %arg4[%c6_40, %c0_41] : memref<8x256xf32, #tpu.memory_space<vmem>>, vector<1x256xf32>
    %73 = vector.broadcast %72 : vector<1x256xf32> to vector<8x256xf32>
    %74 = arith.mulf %71, %73 : vector<8x256xf32>
    %c239_i32_42 = arith.constant 239 : i32
    %75 = tpu.dynamic_rotate %44 by %c239_i32_42 dim 1 : vector<8x256xf32>, i32 -> vector<8x256xf32>
    %c7_43 = arith.constant 7 : index
    %c0_44 = arith.constant 0 : index
    %76 = vector.load %arg4[%c7_43, %c0_44] : memref<8x256xf32, #tpu.memory_space<vmem>>, vector<1x256xf32>
    %77 = vector.broadcast %76 : vector<1x256xf32> to vector<8x256xf32>
    %78 = arith.mulf %75, %77 : vector<8x256xf32>
    %79 = tpu.concatenate %50, %54, %58, %62, %44, %66, %70, %74, %78 in 0 : vector<8x256xf32>, vector<8x256xf32>, vector<8x256xf32>, vector<8x256xf32>, vector<8x256xf32>, vector<8x256xf32>, vector<8x256xf32>, vector<8x256xf32>, vector<8x256xf32> -> vector<72x256xf32>
    %cst_45 = arith.constant dense<0.000000e+00> : vector<8x256xf32>
    %80 = tpu.matmul %46, %79, %cst_45 {dimension_numbers = #tpu.dot_dimension_numbers<[1], [0], [0], [1], [0, 0, 1, 1], [], []>} : vector<8x72xf32>, vector<72x256xf32>, vector<8x256xf32> -> vector<8x256xf32>
    %c0_46 = arith.constant 0 : index
    %c2_47 = arith.constant 2 : index
    %81 = vector.load %arg3[%c0_46, %c2_47] : memref<8x4xf32, #tpu.memory_space<vmem>>, vector<8x1xf32>
    %82 = vector.broadcast %81 : vector<8x1xf32> to vector<8x256xf32>
    %83 = arith.mulf %80, %82 : vector<8x256xf32>
    %c0_48 = arith.constant 0 : index
    %c3_49 = arith.constant 3 : index
    %84 = vector.load %arg3[%c0_48, %c3_49] : memref<8x4xf32, #tpu.memory_space<vmem>>, vector<8x1xf32>
    %85 = vector.broadcast %84 : vector<8x1xf32> to vector<8x256xf32>
    %86 = arith.addf %83, %85 : vector<8x256xf32>
    %87 = arith.addf %0, %86 : vector<8x256xf32>
    %c0_50 = arith.constant 0 : index
    %c0_51 = arith.constant 0 : index
    %88 = vector.load %arg5[%c0_50, %c0_51] : memref<8x256xf32, #tpu.memory_space<vmem>>, vector<8x256xf32>
    tpu.vector_store %arg5[%c0_50, %c0_51], %87 {strides = array<i32>} : memref<8x256xf32, #tpu.memory_space<vmem>>, vector<8x256xf32>,
    return
  }
  func.func @transform_0(%arg0: i32) -> (i32, i32) {
    %c0_i32 = arith.constant 0 : i32
    %c0_i32_0 = arith.constant 0 : i32
    return %arg0, %c0_i32 : i32, i32
  }
  func.func @transform_1(%arg0: i32) -> (i32, i32, i32) {
    %c0_i32 = arith.constant 0 : i32
    %c0_i32_0 = arith.constant 0 : i32
    %c0_i32_1 = arith.constant 0 : i32
    %c0_i32_2 = arith.constant 0 : i32
    return %c0_i32, %c0_i32_0, %c0_i32_1 : i32, i32, i32
  }
  func.func @transform_2(%arg0: i32) -> (i32, i32) {
    %c0_i32 = arith.constant 0 : i32
    %c0_i32_0 = arith.constant 0 : i32
    %c0_i32_1 = arith.constant 0 : i32
    return %c0_i32, %c0_i32_0 : i32, i32
  }
  func.func @transform_3(%arg0: i32) -> (i32, i32) {
    %c0_i32 = arith.constant 0 : i32
    %c0_i32_0 = arith.constant 0 : i32
    %c0_i32_1 = arith.constant 0 : i32
    return %c0_i32, %c0_i32_0 : i32, i32
  }
  func.func @transform_4(%arg0: i32) -> (i32, i32) {
    %c0_i32 = arith.constant 0 : i32
    %c0_i32_0 = arith.constant 0 : i32
    return %arg0, %c0_i32 : i32, i32
  }
}

</mosaic_0001>

<llo_original>
// kernel: tpu_custom_call.1
$region0: #{tpu_custom_call.1}
  #allocation0 [shape = 'u32[]', space=smem, size = 0x4, offset = 0x4, fixed_abs, tag = 'smem constant byte address 0x4 - core index']
  #allocation1 [shape = 'u32[144,128]{1,0:T(1,128)}', space=vmem, size = 0x12000, scoped, tag = 'internal scratch']
  %s0 = inlined_call_operand.hbm [shape: f32[8,256], index: 0, kind: input, shape index: {}]
  %s1 = inlined_call_operand.hbm [shape: f32[2,8,72], index: 1, kind: input, shape index: {}]
  %s2 = inlined_call_operand.vmem [shape: f32[8,4], index: 2, kind: input, shape index: {}]
  %s3 = inlined_call_operand.vmem [shape: f32[8,256], index: 3, kind: input, shape index: {}]
  %s4 = inlined_call_operand.hbm [shape: f32[8,256], index: 4, kind: output, shape index: {}]
  %s5 = sld [smem:[#allocation0]]
  $region34: #{tpu_custom_call.1} parent=0
    _
  %s7 = ssub.s32 1, %s5
  %s8 = scalar_select 0, %s7, %s5
  $region1: #{tpu_custom_call.1} parent=0
    #allocation2 [shape = 'u8[8192]{0}', space=vmem, size = 0x2000, scoped, tag = 'input window, operand 0, single buffered']
    #allocation3 [shape = 's32[1]{0}', space=sflag, size = 0x4, scoped, tag = 'scoped memory for tpu_custom_call.1']
    #allocation4 [shape = 's32[1]{0}', space=sflag, size = 0x4, scoped, tag = 'scoped memory for tpu_custom_call.1']
    #allocation5 [shape = 'u8[8192]{0}', space=vmem, size = 0x2000, scoped, tag = 'input window, operand 1, single buffered']
    #allocation6 [shape = 's32[1]{0}', space=sflag, size = 0x4, scoped, tag = 'scoped memory for tpu_custom_call.1']
    #allocation7 [shape = 'u8[8192]{0}', space=vmem, size = 0x2000, scoped, tag = 'output window, operand 0, single buffered']
    %9 = vsyncpa [#allocation3], 0
    %10 = vsyncpa [#allocation6], 0
    %11 = vsyncpa [#allocation4], 0
    // Predicated region
    $region2: #{tpu_custom_call.1} parent=1 // pred_check
      _
    $region3: #{tpu_custom_call.1} parent=1 // pred_check_branch
      %13 = sbr.rel (0) target = $region5
    $region4: #{tpu_custom_call.1} parent=1 // pred_region
      %s15 = ssub.s32 256, 256
      %16 = vsyncadd [#allocation3], %s15
      %s18 = sshll.u32 [#allocation2], 4
      %s19 = int_to_ptr.vmem [resolvable:$true] %s18
      %21 = dma.hbm_to_vmem [thread:$0]  %s0, 256, %s19, [#allocation3]
    $region5: #{tpu_custom_call.1} parent=1 // pred_fallthru
      _
    // Predicated region
    $region6: #{tpu_custom_call.1} parent=1 // pred_check
      _
    $region7: #{tpu_custom_call.1} parent=1 // pred_check_branch
      %23 = sbr.rel (0) target = $region9
    $region8: #{tpu_custom_call.1} parent=1 // pred_region
      %s25 = ssub.s32 256, 256
      %26 = vsyncadd [#allocation6], %s25
      %s27 = sshll.u32 [#allocation5], 4
      %s28 = int_to_ptr.vmem [resolvable:$true] %s27
      %33 = dma.hbm_to_vmem [thread:$0]  %s1, 256, %s28, [#allocation6], 128, 128, 8
    $region9: #{tpu_custom_call.1} parent=1 // pred_fallthru
      _
    // Predicated region
    $region10: #{tpu_custom_call.1} parent=1 // pred_check
      _
    $region11: #{tpu_custom_call.1} parent=1 // pred_check_branch
      %35 = sbr.rel (0) target = $region13
    $region12: #{tpu_custom_call.1} parent=1 // pred_region
      _
    $region13: #{tpu_custom_call.1} parent=1 // pred_fallthru
      _
    // Predicated region
    $region14: #{tpu_custom_call.1} parent=1 // pred_check
      _
    $region15: #{tpu_custom_call.1} parent=1 // pred_check_branch
      %37 = sbr.rel (0) target = $region17
    $region16: #{tpu_custom_call.1} parent=1 // pred_region
      _
    $region17: #{tpu_custom_call.1} parent=1 // pred_fallthru
      _
    // Predicated region
    $region18: #{tpu_custom_call.1} parent=1 // pred_check
      _
    $region19: #{tpu_custom_call.1} parent=1 // pred_check_branch
      %39 = sbr.rel (0) target = $region21
    $region20: #{tpu_custom_call.1} parent=1 // pred_region
      %40 = dma.done [#allocation3], 256
    $region21: #{tpu_custom_call.1} parent=1 // pred_fallthru
      _
    // Predicated region
    $region22: #{tpu_custom_call.1} parent=1 // pred_check
      _
    $region23: #{tpu_custom_call.1} parent=1 // pred_check_branch
      %42 = sbr.rel (0) target = $region25
    $region24: #{tpu_custom_call.1} parent=1 // pred_region
      %43 = dma.done [#allocation6], 256
    $region25: #{tpu_custom_call.1} parent=1 // pred_fallthru
      _
    %v44 = vld [vmem:[#allocation2] sm:$0xff]
    %v45 = vld [vmem:[#allocation2 + $0x8] sm:$0xff]
    %v46 = vld [vmem:[#allocation5] sm:$0xff]
    %47 = vrot.lane.b32.xlu0 %v44, 17
    %v48 = vpop.permute.xlu0 %47
    %49 = vrot.lane.b32.xlu0 %v45, 17
    %v50 = vpop.permute.xlu0 %49
    %v51 = vlaneseq
    %v52 = vand.u32 %v51, 127
    %vm53 = vcmp.lt.s32.totalorder %v52, 17
    %v54 = vsel %vm53, %v48, %v50
    %v55 = vsel %vm53, %v50, %v48
    %v56 = vld [vmem:[%s3] ss:$8 sm:$0x3]
    %v58 = vlaneseq
    %v59 = vshrl.u32 %v58, 7
    %v60 = vsub.s32 0, %v59
    %v61 = vrot.slane %v56, %v60
    %v62 = vlaneseq
    %v63 = vshrl.u32 %v62, 7
    %v64 = vsub.s32 1, %v63
    %v65 = vrot.slane %v56, %v64
    %v68 = vmul.f32 %v55, %v61
    %v69 = vmul.f32 %v54, %v65
    %70 = vrot.lane.b32.xlu0 %v44, 16
    %v71 = vpop.permute.xlu0 %70
    %72 = vrot.lane.b32.xlu0 %v45, 16
    %v73 = vpop.permute.xlu0 %72
    %vm74 = vcmp.lt.s32.totalorder %v52, 16
    %v75 = vsel %vm74, %v71, %v73
    %v76 = vsel %vm74, %v73, %v71
    %s77 = scalar_lea.vmem %s3, 1
    %v78 = vld [vmem:[%s77] ss:$8 sm:$0x3]
    %v80 = vlaneseq
    %v81 = vshrl.u32 %v80, 7
    %v82 = vsub.s32 0, %v81
    %v83 = vrot.slane %v78, %v82
    %v84 = vlaneseq
    %v85 = vshrl.u32 %v84, 7
    %v86 = vsub.s32 1, %v85
    %v87 = vrot.slane %v78, %v86
    %v90 = vmul.f32 %v76, %v83
    %v91 = vmul.f32 %v75, %v87
    %92 = vrot.lane.b32.xlu0 %v44, 15
    %v93 = vpop.permute.xlu0 %92
    %94 = vrot.lane.b32.xlu0 %v45, 15
    %v95 = vpop.permute.xlu0 %94
    %vm96 = vcmp.lt.s32.totalorder %v52, 15
    %v97 = vsel %vm96, %v93, %v95
    %v98 = vsel %vm96, %v95, %v93
    %s99 = scalar_lea.vmem %s3, 2
    %v100 = vld [vmem:[%s99] ss:$8 sm:$0x3]
    %v102 = vlaneseq
    %v103 = vshrl.u32 %v102, 7
    %v104 = vsub.s32 0, %v103
    %v105 = vrot.slane %v100, %v104
    %v106 = vlaneseq
    %v107 = vshrl.u32 %v106, 7
    %v108 = vsub.s32 1, %v107
    %v109 = vrot.slane %v100, %v108
    %v112 = vmul.f32 %v98, %v105
    %v113 = vmul.f32 %v97, %v109
    %114 = vrot.lane.b32.xlu0 %v44, 1
    %v115 = vpop.permute.xlu0 %114
    %116 = vrot.lane.b32.xlu0 %v45, 1
    %v117 = vpop.permute.xlu0 %116
    %vm118 = vcmp.lt.s32.totalorder %v52, 1
    %v119 = vsel %vm118, %v115, %v117
    %v120 = vsel %vm118, %v117, %v115
    %s121 = scalar_lea.vmem %s3, 3
    %v122 = vld [vmem:[%s121] ss:$8 sm:$0x3]
    %v124 = vlaneseq
    %v125 = vshrl.u32 %v124, 7
    %v126 = vsub.s32 0, %v125
    %v127 = vrot.slane %v122, %v126
    %v128 = vlaneseq
    %v129 = vshrl.u32 %v128, 7
    %v130 = vsub.s32 1, %v129
    %v131 = vrot.slane %v122, %v130
    %v134 = vmul.f32 %v120, %v127
    %v135 = vmul.f32 %v119, %v131
    %136 = vrot.lane.b32.xlu0 %v44, 127
    %v137 = vpop.permute.xlu0 %136
    %138 = vrot.lane.b32.xlu0 %v45, 127
    %v139 = vpop.permute.xlu0 %138
    %vm140 = vcmp.lt.s32.totalorder %v52, 127
    %v141 = vsel %vm140, %v137, %v139
    %v142 = vsel %vm140, %v139, %v137
    %s143 = scalar_lea.vmem %s3, 4
    %v144 = vld [vmem:[%s143] ss:$8 sm:$0x3]
    %v146 = vlaneseq
    %v147 = vshrl.u32 %v146, 7
    %v148 = vsub.s32 0, %v147
    %v149 = vrot.slane %v144, %v148
    %v150 = vlaneseq
    %v151 = vshrl.u32 %v150, 7
    %v152 = vsub.s32 1, %v151
    %v153 = vrot.slane %v144, %v152
    %v156 = vmul.f32 %v141, %v149
    %v157 = vmul.f32 %v142, %v153
    %158 = vrot.lane.b32.xlu0 %v44, 113
    %v159 = vpop.permute.xlu0 %158
    %160 = vrot.lane.b32.xlu0 %v45, 113
    %v161 = vpop.permute.xlu0 %160
    %vm162 = vcmp.lt.s32.totalorder %v52, 113
    %v163 = vsel %vm162, %v159, %v161
    %v164 = vsel %vm162, %v161, %v159
    %s165 = scalar_lea.vmem %s3, 5
    %v166 = vld [vmem:[%s165] ss:$8 sm:$0x3]
    %v168 = vlaneseq
    %v169 = vshrl.u32 %v168, 7
    %v170 = vsub.s32 0, %v169
    %v171 = vrot.slane %v166, %v170
    %v172 = vlaneseq
    %v173 = vshrl.u32 %v172, 7
    %v174 = vsub.s32 1, %v173
    %v175 = vrot.slane %v166, %v174
    %v178 = vmul.f32 %v163, %v171
    %v179 = vmul.f32 %v164, %v175
    %180 = vrot.lane.b32.xlu0 %v44, 112
    %v181 = vpop.permute.xlu0 %180
    %182 = vrot.lane.b32.xlu0 %v45, 112
    %v183 = vpop.permute.xlu0 %182
    %vm184 = vcmp.lt.s32.totalorder %v52, 112
    %v185 = vsel %vm184, %v181, %v183
    %v186 = vsel %vm184, %v183, %v181
    %s187 = scalar_lea.vmem %s3, 6
    %v188 = vld [vmem:[%s187] ss:$8 sm:$0x3]
    %v190 = vlaneseq
    %v191 = vshrl.u32 %v190, 7
    %v192 = vsub.s32 0, %v191
    %v193 = vrot.slane %v188, %v192
    %v194 = vlaneseq
    %v195 = vshrl.u32 %v194, 7
    %v196 = vsub.s32 1, %v195
    %v197 = vrot.slane %v188, %v196
    %v200 = vmul.f32 %v185, %v193
    %v201 = vmul.f32 %v186, %v197
    %202 = vrot.lane.b32.xlu0 %v44, 111
    %v203 = vpop.permute.xlu0 %202
    %204 = vrot.lane.b32.xlu0 %v45, 111
    %v205 = vpop.permute.xlu0 %204
    %vm206 = vcmp.lt.s32.totalorder %v52, 111
    %v207 = vsel %vm206, %v203, %v205
    %v208 = vsel %vm206, %v205, %v203
    %s209 = scalar_lea.vmem %s3, 7
    %v210 = vld [vmem:[%s209] ss:$8 sm:$0x3]
    %v212 = vlaneseq
    %v213 = vshrl.u32 %v212, 7
    %v214 = vsub.s32 0, %v213
    %v215 = vrot.slane %v210, %v214
    %v216 = vlaneseq
    %v217 = vshrl.u32 %v216, 7
    %v218 = vsub.s32 1, %v217
    %v219 = vrot.slane %v210, %v218
    %v222 = vmul.f32 %v207, %v215
    %v223 = vmul.f32 %v208, %v219
    %vm224 = vcmask 588800
    %v226 = vsel %vm224, %v46, 0
    %228 = vmatprep.subr.mxu0 %v69
    %229 = vmatpush1.msra.mxu0 %v68
    %230 = vmatprep.subr.mxu0 %v91
    %231 = vmatpush1.msra.mxu0 %v90
    %232 = vmatprep.subr.mxu0 %v113
    %233 = vmatpush1.msra.mxu0 %v112
    %234 = vmatprep.subr.mxu0 %v135
    %235 = vmatpush1.msra.mxu0 %v134
    %236 = vmatprep.subr.mxu0 %v45
    %237 = vmatpush1.msra.mxu0 %v44
    %238 = vmatprep.subr.mxu0 %v157
    %239 = vmatpush1.msra.mxu0 %v156
    %240 = vmatprep.subr.mxu0 %v179
    %241 = vmatpush1.msra.mxu0 %v178
    %242 = vmatprep.subr.mxu0 %v201
    %243 = vmatpush1.msra.mxu0 %v200
    %244 = vmatprep.subr.mxu0 %v223
    %245 = vmatpush1.msra.mxu0 %v222
    %246 = vmatprep.subr.mxu0 0.0
    %247 = vmatpush1.msra.mxu0 0.0
    %248 = vmatprep.subr.mxu0 0.0
    %249 = vmatpush1.msra.mxu0 0.0
    %250 = vmatprep.subr.mxu0 0.0
    %251 = vmatpush1.msra.mxu0 0.0
    %252 = vmatprep.subr.mxu0 0.0
    %253 = vmatpush1.msra.mxu0 0.0
    %254 = vmatprep.subr.mxu0 0.0
    %255 = vmatpush1.msra.mxu0 0.0
    %256 = vmatprep.subr.mxu0 0.0
    %257 = vmatpush1.msra.mxu0 0.0
    %258 = vmatprep.subr.mxu0 0.0
    %259 = vmatpush1.msra.mxu0 0.0
    %260 = vmatprep.subr.mxu0 0.0
    %261 = vmatpush1.msra.mxu0 0.0
    %262 = vmatprep.subr.mxu0 0.0
    %263 = vmatpush1.msra.mxu0 0.0
    %264 = vmatprep.subr.mxu0 0.0
    %265 = vmatpush1.msra.mxu0 0.0
    %266 = vmatprep.subr.mxu0 0.0
    %267 = vmatpush1.msra.mxu0 0.0
    %268 = vmatprep.subr.mxu0 0.0
    %269 = vmatpush1.msra.mxu0 0.0
    %270 = vmatprep.subr.mxu0 0.0
    %271 = vmatpush1.msra.mxu0 0.0
    %272 = vmatprep.subr.mxu0 0.0
    %273 = vmatpush1.msra.mxu0 0.0
    %274 = vmatprep.subr.mxu0 0.0
    %275 = vmatpush1.msra.mxu0 0.0
    %276 = vmatprep.subr.mxu0 0.0
    %277 = vmatpush1.msra.mxu0 0.0
    %278 = vmatprep.subr.mxu0 0.0
    %279 = vmatpush1.msra.mxu0 0.0
    %280 = vmatprep.subr.mxu0 0.0
    %281 = vmatpush1.msra.mxu0 0.0
    %282 = vmatprep.subr.mxu0 0.0
    %283 = vmatpush1.msra.mxu0 0.0
    %284 = vmatprep.subr.mxu0 0.0
    %285 = vmatpush1.msra.mxu0 0.0
    %286 = vmatprep.subr.mxu0 0.0
    %287 = vmatpush1.msra.mxu0 0.0
    %288 = vmatprep.subr.mxu0 0.0
    %289 = vmatpush1.msra.mxu0 0.0
    %290 = vmatprep.subr.mxu0 0.0
    %291 = vmatpush1.msra.mxu0 0.0
    %292 = vmatprep.mubr.f32.mxu0 0.0
    %293 = vmatmul.mubr.f32.gmra.mrb[0].mxu0 %v226
    %v294 = vpop.f32.mrb[0].mxu0
    %v295 = vadd.f32 0.0, %v294
    %v296 = vpop.f32.mrb[0].mxu0
    %v297 = vadd.f32 0.0, %v296
    %298 = vdwg.mxu0
    %v299 = vld [vmem:[%s2] sm:$0xff]
    %301 = vset.pattern.permute.xlu0 0
    %302 = vperm.xlu0 %301, %v299
    %v303 = vpop.permute.xlu0 %302
    %v305 = vmul.f32 %v295, %v303
    %v306 = vmul.f32 %v297, %v303
    %307 = vset.pattern.permute.xlu0 1
    %308 = vperm.xlu0 %307, %v299
    %v309 = vpop.permute.xlu0 %308
    %v311 = vadd.f32 %v305, %v309
    %v312 = vadd.f32 %v306, %v309
    %v313 = vmax.f32 %v311, 0.0
    %v314 = vmax.f32 %v312, 0.0
    %s315 = scalar_lea.vmem [#allocation5], 8
    %v316 = vld [vmem:[%s315] sm:$0xff]
    %317 = vrot.lane.b32.xlu0 %v313, 17
    %v318 = vpop.permute.xlu0 %317
    %319 = vrot.lane.b32.xlu0 %v314, 17
    %v320 = vpop.permute.xlu0 %319
    %v321 = vsel %vm53, %v318, %v320
    %v322 = vsel %vm53, %v320, %v318
    %v323 = vmul.f32 %v322, %v61
    %v324 = vmul.f32 %v321, %v65
    %325 = vrot.lane.b32.xlu0 %v313, 16
    %v326 = vpop.permute.xlu0 %325
    %327 = vrot.lane.b32.xlu0 %v314, 16
    %v328 = vpop.permute.xlu0 %327
    %v329 = vsel %vm74, %v326, %v328
    %v330 = vsel %vm74, %v328, %v326
    %v331 = vmul.f32 %v330, %v83
    %v332 = vmul.f32 %v329, %v87
    %333 = vrot.lane.b32.xlu0 %v313, 15
    %v334 = vpop.permute.xlu0 %333
    %335 = vrot.lane.b32.xlu0 %v314, 15
    %v336 = vpop.permute.xlu0 %335
    %v337 = vsel %vm96, %v334, %v336
    %v338 = vsel %vm96, %v336, %v334
    %v339 = vmul.f32 %v338, %v105
    %v340 = vmul.f32 %v337, %v109
    %341 = vrot.lane.b32.xlu0 %v313, 1
    %v342 = vpop.permute.xlu0 %341
    %343 = vrot.lane.b32.xlu0 %v314, 1
    %v344 = vpop.permute.xlu0 %343
    %v345 = vsel %vm118, %v342, %v344
    %v346 = vsel %vm118, %v344, %v342
    %v347 = vmul.f32 %v346, %v127
    %v348 = vmul.f32 %v345, %v131
    %349 = vrot.lane.b32.xlu0 %v313, 127
    %v350 = vpop.permute.xlu0 %349
    %351 = vrot.lane.b32.xlu0 %v314, 127
    %v352 = vpop.permute.xlu0 %351
    %v353 = vsel %vm140, %v350, %v352
    %v354 = vsel %vm140, %v352, %v350
    %v355 = vmul.f32 %v353, %v149
    %v356 = vmul.f32 %v354, %v153
    %357 = vrot.lane.b32.xlu0 %v313, 113
    %v358 = vpop.permute.xlu0 %357
    %359 = vrot.lane.b32.xlu0 %v314, 113
    %v360 = vpop.permute.xlu0 %359
    %v361 = vsel %vm162, %v358, %v360
    %v362 = vsel %vm162, %v360, %v358
    %v363 = vmul.f32 %v361, %v171
    %v364 = vmul.f32 %v362, %v175
    %365 = vrot.lane.b32.xlu0 %v313, 112
    %v366 = vpop.permute.xlu0 %365
    %367 = vrot.lane.b32.xlu0 %v314, 112
    %v368 = vpop.permute.xlu0 %367
    %v369 = vsel %vm184, %v366, %v368
    %v370 = vsel %vm184, %v368, %v366
    %v371 = vmul.f32 %v369, %v193
    %v372 = vmul.f32 %v370, %v197
    %373 = vrot.lane.b32.xlu0 %v313, 111
    %v374 = vpop.permute.xlu0 %373
    %375 = vrot.lane.b32.xlu0 %v314, 111
    %v376 = vpop.permute.xlu0 %375
    %v377 = vsel %vm206, %v374, %v376
    %v378 = vsel %vm206, %v376, %v374
    %v379 = vmul.f32 %v377, %v215
    %v380 = vmul.f32 %v378, %v219
    %v382 = vsel %vm224, %v316, 0
    %384 = vmatprep.subr.mxu0 %v324
    %385 = vmatpush1.msra.mxu0 %v323
    %386 = vmatprep.subr.mxu0 %v332
    %387 = vmatpush1.msra.mxu0 %v331
    %388 = vmatprep.subr.mxu0 %v340
    %389 = vmatpush1.msra.mxu0 %v339
    %390 = vmatprep.subr.mxu0 %v348
    %391 = vmatpush1.msra.mxu0 %v347
    %392 = vmatprep.subr.mxu0 %v314
    %393 = vmatpush1.msra.mxu0 %v313
    %394 = vmatprep.subr.mxu0 %v356
    %395 = vmatpush1.msra.mxu0 %v355
    %396 = vmatprep.subr.mxu0 %v364
    %397 = vmatpush1.msra.mxu0 %v363
    %398 = vmatprep.subr.mxu0 %v372
    %399 = vmatpush1.msra.mxu0 %v371
    %400 = vmatprep.subr.mxu0 %v380
    %401 = vmatpush1.msra.mxu0 %v379
    %402 = vmatprep.subr.mxu0 0.0
    %403 = vmatpush1.msra.mxu0 0.0
    %404 = vmatprep.subr.mxu0 0.0
    %405 = vmatpush1.msra.mxu0 0.0
    %406 = vmatprep.subr.mxu0 0.0
    %407 = vmatpush1.msra.mxu0 0.0
    %408 = vmatprep.subr.mxu0 0.0
    %409 = vmatpush1.msra.mxu0 0.0
    %410 = vmatprep.subr.mxu0 0.0
    %411 = vmatpush1.msra.mxu0 0.0
    %412 = vmatprep.subr.mxu0 0.0
    %413 = vmatpush1.msra.mxu0 0.0
    %414 = vmatprep.subr.mxu0 0.0
    %415 = vmatpush1.msra.mxu0 0.0
    %416 = vmatprep.subr.mxu0 0.0
    %417 = vmatpush1.msra.mxu0 0.0
    %418 = vmatprep.subr.mxu0 0.0
    %419 = vmatpush1.msra.mxu0 0.0
    %420 = vmatprep.subr.mxu0 0.0
    %421 = vmatpush1.msra.mxu0 0.0
    %422 = vmatprep.subr.mxu0 0.0
    %423 = vmatpush1.msra.mxu0 0.0
    %424 = vmatprep.subr.mxu0 0.0
    %425 = vmatpush1.msra.mxu0 0.0
    %426 = vmatprep.subr.mxu0 0.0
    %427 = vmatpush1.msra.mxu0 0.0
    %428 = vmatprep.subr.mxu0 0.0
    %429 = vmatpush1.msra.mxu0 0.0
    %430 = vmatprep.subr.mxu0 0.0
    %431 = vmatpush1.msra.mxu0 0.0
    %432 = vmatprep.subr.mxu0 0.0
    %433 = vmatpush1.msra.mxu0 0.0
    %434 = vmatprep.subr.mxu0 0.0
    %435 = vmatpush1.msra.mxu0 0.0
    %436 = vmatprep.subr.mxu0 0.0
    %437 = vmatpush1.msra.mxu0 0.0
    %438 = vmatprep.subr.mxu0 0.0
    %439 = vmatpush1.msra.mxu0 0.0
    %440 = vmatprep.subr.mxu0 0.0
    %441 = vmatpush1.msra.mxu0 0.0
    %442 = vmatprep.subr.mxu0 0.0
    %443 = vmatpush1.msra.mxu0 0.0
    %444 = vmatprep.subr.mxu0 0.0
    %445 = vmatpush1.msra.mxu0 0.0
    %446 = vmatprep.subr.mxu0 0.0
    %447 = vmatpush1.msra.mxu0 0.0
    %448 = vmatprep.mubr.f32.mxu0 0.0
    %449 = vmatmul.mubr.f32.gmra.mrb[0].mxu0 %v382
    %v450 = vpop.f32.mrb[0].mxu0
    %v451 = vadd.f32 0.0, %v450
    %v452 = vpop.f32.mrb[0].mxu0
    %v453 = vadd.f32 0.0, %v452
    %454 = vdwg.mxu0
    %455 = vset.pattern.permute.xlu0 2
    %456 = vperm.xlu0 %455, %v299
    %v457 = vpop.permute.xlu0 %456
    %v459 = vmul.f32 %v451, %v457
    %v460 = vmul.f32 %v453, %v457
    %461 = vset.pattern.permute.xlu0 3
    %462 = vperm.xlu0 %461, %v299
    %v463 = vpop.permute.xlu0 %462
    %v465 = vadd.f32 %v459, %v463
    %v466 = vadd.f32 %v460, %v463
    %v467 = vadd.f32 %v44, %v465
    %v468 = vadd.f32 %v45, %v466
    %469 = vst [vmem:[#allocation7] sm:$0xff] %v467
    %470 = vst [vmem:[#allocation7 + $0x8] sm:$0xff] %v468
    // Predicated region
    $region26: #{tpu_custom_call.1} parent=1 // pred_check
      _
    $region27: #{tpu_custom_call.1} parent=1 // pred_check_branch
      %472 = sbr.rel (0) target = $region29
    $region28: #{tpu_custom_call.1} parent=1 // pred_region
      %s474 = ssub.s32 256, 256
      %475 = vsyncadd [#allocation4], %s474
      %s477 = sshll.u32 [#allocation7], 4
      %s478 = int_to_ptr.vmem [resolvable:$true] %s477
      %480 = dma.vmem_to_hbm [thread:$0]  %s478, 256, %s4, [#allocation4]
    $region29: #{tpu_custom_call.1} parent=1 // pred_fallthru
      _
    // Predicated region
    $region30: #{tpu_custom_call.1} parent=1 // pred_check
      _
    $region31: #{tpu_custom_call.1} parent=1 // pred_check_branch
      %482 = sbr.rel (0) target = $region33
    $region32: #{tpu_custom_call.1} parent=1 // pred_region
      %483 = dma.done [#allocation4], 256
    $region33: #{tpu_custom_call.1} parent=1 // pred_fallthru
      _
    %484 = vsyncpa [#allocation3], 1
    %485 = vsyncpa [#allocation6], 1
    %486 = vsyncpa [#allocation4], 1

</llo_original>
